<compile_context>
chip_gen: v7x
topology: tpu7x:2x2x1
jax: 0.10.0
libtpu: 0.0.40
codegen_flags: <defaults>
</compile_context>

<pallas_src>
import jax
import jax.numpy as jnp
from jax.experimental import pallas as pl
from jax.experimental.pallas import tpu as pltpu


def _round_up(n, m):
    return (n + m - 1) // m * m


def _residual_mlp_kernel(x_ref, w1_ref, b1_ref, w2_ref, b2_ref, o_ref):
    # x_ref: (tm, Dp) input dtype, w1: (Dp, Hp) mxu dtype, b1: (1, Hp) f32,
    # w2: (Hp, Dp) mxu dtype, b2: (1, Dp) f32, o_ref: (tm, Dp) input dtype.
    x = x_ref[...]
    # MXU inputs in the (possibly lower-precision) weight dtype, f32 accum.
    h = jnp.dot(x.astype(w1_ref.dtype), w1_ref[...],
                preferred_element_type=jnp.float32)
    # f32 epilogue: bias + GELU (EUP slot), then second matmul.
    h = jax.nn.gelu(h + b1_ref[...])
    y = jnp.dot(h.astype(w2_ref.dtype), w2_ref[...],
                preferred_element_type=jnp.float32)
    y = y + b2_ref[...]
    # Fused residual: fn(x) + x, added in f32 (skip cast when already f32).
    x_f32 = x if x.dtype == jnp.float32 else x.astype(jnp.float32)
    o_ref[...] = (y + x_f32).astype(o_ref.dtype)


def _pick_row_tile(N, Dp, Hp, x_bytes, w_bytes, tm_req, vmem_budget):
    """Largest row tile (multiple of 8) that fits the VMEM budget."""
    # Fixed residents: double-buffered weight tiles (constant index map still
    # allocates 2 buffers) + biases.
    fixed = 2 * 2 * Dp * Hp * w_bytes + 2 * (Hp + Dp) * 4
    # Per-row cost: double-buffered x tile + out tile, f32 hidden activation,
    # f32 y and residual copies inside the kernel body.
    per_row = 2 * Dp * x_bytes + 2 * Dp * x_bytes + Hp * 4 + 2 * Dp * 4
    avail = max(vmem_budget - fixed, per_row * 8)
    tm_fit = max(8, (avail // per_row) // 8 * 8)
    tm = min(tm_req, tm_fit, _round_up(N, 8))
    return _round_up(max(tm, 8), 8)


def residual_mlp(x, w1, b1, w2, b2, *, tm=256, mxu_dtype=jnp.bfloat16):
    """out = gelu(x @ w1 + b1) @ w2 + b2 + x, row-tiled Pallas kernel.

    D and H are zero-padded to multiples of 128 (lane-dense), rows are padded
    to a multiple of the row tile, and both matmuls run with `mxu_dtype`
    inputs (pass None to keep the input dtype) and f32 accumulation.
    """
    B, L, D = x.shape
    H = w1.shape[1]
    N = B * L

    Dp = _round_up(D, 128)          # lane-dense channels
    Hp = _round_up(H, 128)          # lane-dense hidden

    w_dtype = x.dtype if mxu_dtype is None else mxu_dtype
    x_bytes = jnp.dtype(x.dtype).itemsize
    w_bytes = jnp.dtype(w_dtype).itemsize

    # Row tile: as large as the VMEM budget allows (keeps the MXU busy and the
    # per-grid-step overhead amortized), never over-padding tiny inputs.
    # TODO(synk): for very large D/H the weights should get an H-tiled
    # reduction grid axis instead of being fully resident.
    vmem_budget = 30 << 20          # conservative: fits v5e/v6e/v7x scoped VMEM
    tm = _pick_row_tile(N, Dp, Hp, x_bytes, w_bytes, tm, vmem_budget)
    Np = _round_up(N, tm)

    x2 = x.reshape(N, D)
    if (Np, Dp) != (N, D):
        x2 = jnp.pad(x2, ((0, Np - N), (0, Dp - D)))

    if (Dp, Hp) != (D, H):
        w1p = jnp.pad(w1, ((0, Dp - D), (0, Hp - H)))
        w2p = jnp.pad(w2, ((0, Hp - H), (0, Dp - D)))
        b1p = jnp.pad(b1, (0, Hp - H))
        b2p = jnp.pad(b2, (0, Dp - D))
    else:
        w1p, w2p, b1p, b2p = w1, w2, b1, b2
    w1p = w1p.astype(w_dtype)
    w2p = w2p.astype(w_dtype)
    b1p = b1p.reshape(1, Hp).astype(jnp.float32)
    b2p = b2p.reshape(1, Dp).astype(jnp.float32)

    # Advisory cost estimate so XLA schedules the custom call sensibly.
    cost = pl.CostEstimate(
        flops=4 * Np * Dp * Hp + 4 * Np * Dp,
        transcendentals=Np * Hp,
        bytes_accessed=(2 * Np * Dp * x_bytes          # x in + out
                        + 2 * Dp * Hp * w_bytes        # w1 + w2
                        + (Hp + Dp) * 4),              # biases
    )

    # Scoped-VMEM limit with headroom over the estimate used to pick tm.
    vmem_est = (2 * 2 * tm * Dp * x_bytes
                + 2 * 2 * Dp * Hp * w_bytes
                + 2 * (Hp + Dp) * 4
                + tm * Hp * 4 + 2 * tm * Dp * 4)
    vmem_limit = int(min(max(2 * vmem_est, 32 << 20), 64 << 20))

    out = pl.pallas_call(
        _residual_mlp_kernel,
        out_shape=jax.ShapeDtypeStruct((Np, Dp), x.dtype),
        grid_spec=pltpu.PrefetchScalarGridSpec(
            num_scalar_prefetch=0,
            grid=(Np // tm,),
            in_specs=[
                pl.BlockSpec((tm, Dp), lambda i: (i, 0)),   # x rows
                pl.BlockSpec((Dp, Hp), lambda i: (0, 0)),   # w1 (resident)
                pl.BlockSpec((1, Hp), lambda i: (0, 0)),    # b1
                pl.BlockSpec((Hp, Dp), lambda i: (0, 0)),   # w2 (resident)
                pl.BlockSpec((1, Dp), lambda i: (0, 0)),    # b2
            ],
            out_specs=pl.BlockSpec((tm, Dp), lambda i: (i, 0)),
        ),
        compiler_params=pltpu.CompilerParams(
            dimension_semantics=("parallel",),
            vmem_limit_bytes=vmem_limit,
        ),
        cost_estimate=cost,
    )(x2, w1p, b1p, w2p, b2p)

    if (Np, Dp) != (N, D):
        out = out[:N, :D]
    return out.reshape(B, L, D)


def reference_f32(x, w1, b1, w2, b2):
    h = jax.nn.gelu(jnp.dot(x, w1) + b1)
    return jnp.dot(h, w2) + b2 + x


def reference_matched(x, w1, b1, w2, b2, mxu_dtype):
    # Mirrors the kernel's compute recipe: low-precision MXU inputs,
    # f32 accumulation and f32 epilogue.
    h = jnp.dot(x.astype(mxu_dtype), w1.astype(mxu_dtype),
                preferred_element_type=jnp.float32)
    h = jax.nn.gelu(h + b1.astype(jnp.float32))
    y = jnp.dot(h.astype(mxu_dtype), w2.astype(mxu_dtype),
                preferred_element_type=jnp.float32)
    y = y + b2.astype(jnp.float32)
    return (y + x.astype(jnp.float32)).astype(x.dtype)


if __name__ == "__main__":
    B, L, D, H = 2, 8, 32, 64
    key = jax.random.PRNGKey(0)
    kx, k1, k2, k3, k4 = jax.random.split(key, 5)

    x = jax.random.normal(kx, (B, L, D), dtype=jnp.float32)
    # deterministic synthetic parameter init (Linear(D,H) + Linear(H,D))
    w1 = jax.random.normal(k1, (D, H), dtype=jnp.float32) * (1.0 / D ** 0.5)
    b1 = jax.random.normal(k2, (H,), dtype=jnp.float32) * 0.01
    w2 = jax.random.normal(k3, (H, D), dtype=jnp.float32) * (1.0 / H ** 0.5)
    b2 = jax.random.normal(k4, (D,), dtype=jnp.float32) * 0.01

    out = residual_mlp(x, w1, b1, w2, b2)
    jax.block_until_ready(out)

    assert out.shape == x.shape and out.dtype == x.dtype

    # Tight check against the same compute recipe (bf16 MXU, f32 epilogue).
    ref_bf16 = reference_matched(x.reshape(-1, D), w1, b1, w2, b2,
                                 jnp.bfloat16).reshape(B, L, D)
    assert jnp.allclose(out, ref_bf16, atol=1e-4, rtol=1e-4), \
        "mismatch vs precision-matched reference"

    # Loose check against the pure-f32 module semantics (bf16 MXU rounding).
    ref_f32 = reference_f32(x, w1, b1, w2, b2)
    assert jnp.allclose(out, ref_f32, atol=5e-2, rtol=5e-2), \
        "mismatch vs f32 reference"

    print("KERNEL_OK")
</pallas_src>

<mosaic_0001>
module attributes {stable_mosaic.version = 11 : i64} {
  func.func @_residual_mlp_kernel(%arg0: i32, %arg1: memref<16x128xf32, #tpu.memory_space<vmem>>, %arg2: memref<128x128xbf16, #tpu.memory_space<vmem>>, %arg3: memref<1x128xf32, #tpu.memory_space<vmem>>, %arg4: memref<128x128xbf16, #tpu.memory_space<vmem>>, %arg5: memref<1x128xf32, #tpu.memory_space<vmem>>, %arg6: memref<16x128xf32, #tpu.memory_space<vmem>>) attributes {dimension_semantics = [#tpu.dimension_semantics<parallel>], iteration_bounds = array<i64: 1>, scalar_prefetch = 0 : i64, scratch_operands = 0 : i64, tpu.core_type = #tpu.core_type<tc>, window_params = [{transform_indices = @transform_0, window_bounds = array<i64: 16, 128>}, {pipeline_mode = #tpu.pipeline_mode<synchronous>, transform_indices = @transform_1, window_bounds = array<i64: 128, 128>}, {pipeline_mode = #tpu.pipeline_mode<synchronous>, transform_indices = @transform_2, window_bounds = array<i64: 1, 128>}, {pipeline_mode = #tpu.pipeline_mode<synchronous>, transform_indices = @transform_3, window_bounds = array<i64: 128, 128>}, {pipeline_mode = #tpu.pipeline_mode<synchronous>, transform_indices = @transform_4, window_bounds = array<i64: 1, 128>}, {transform_indices = @transform_5, window_bounds = array<i64: 16, 128>}]} {
    %c0 = arith.constant 0 : index
    %c0_0 = arith.constant 0 : index
    %0 = vector.load %arg1[%c0, %c0_0] : memref<16x128xf32, #tpu.memory_space<vmem>>, vector<16x128xf32>
    %1 = arith.truncf %0 : vector<16x128xf32> to vector<16x128xbf16>
    %c0_1 = arith.constant 0 : index
    %c0_2 = arith.constant 0 : index
    %2 = vector.load %arg2[%c0_1, %c0_2] : memref<128x128xbf16, #tpu.memory_space<vmem>>, vector<128x128xbf16>
    %cst = arith.constant dense<0.000000e+00> : vector<16x128xf32>
    %3 = tpu.matmul %1, %2, %cst {dimension_numbers = #tpu.dot_dimension_numbers<[1], [0], [0], [1], [0, 0, 1, 1], [], []>} : vector<16x128xbf16>, vector<128x128xbf16>, vector<16x128xf32> -> vector<16x128xf32>
    %c0_3 = arith.constant 0 : index
    %c0_4 = arith.constant 0 : index
    %4 = vector.load %arg3[%c0_3, %c0_4] : memref<1x128xf32, #tpu.memory_space<vmem>>, vector<1x128xf32>
    %5 = vector.broadcast %4 : vector<1x128xf32> to vector<16x128xf32>
    %6 = arith.addf %3, %5 : vector<16x128xf32>
    %7 = arith.mulf %6, %6 : vector<16x128xf32>
    %8 = arith.mulf %6, %7 : vector<16x128xf32>
    %cst_5 = arith.constant 4.471500e-02 : f32
    %9 = vector.broadcast %cst_5 : f32 to vector<16x128xf32>
    %10 = arith.mulf %9, %8 : vector<16x128xf32>
    %11 = arith.addf %6, %10 : vector<16x128xf32>
    %cst_6 = arith.constant 0.797884583 : f32
    %12 = vector.broadcast %cst_6 : f32 to vector<16x128xf32>
    %13 = arith.mulf %12, %11 : vector<16x128xf32>
    %14 = math.tanh %13 : vector<16x128xf32>
    %cst_7 = arith.constant 1.000000e+00 : f32
    %15 = vector.broadcast %cst_7 : f32 to vector<16x128xf32>
    %16 = arith.addf %15, %14 : vector<16x128xf32>
    %cst_8 = arith.constant 5.000000e-01 : f32
    %17 = vector.broadcast %cst_8 : f32 to vector<16x128xf32>
    %18 = arith.mulf %17, %16 : vector<16x128xf32>
    %19 = arith.mulf %6, %18 : vector<16x128xf32>
    %20 = arith.truncf %19 : vector<16x128xf32> to vector<16x128xbf16>
    %c0_9 = arith.constant 0 : index
    %c0_10 = arith.constant 0 : index
    %21 = vector.load %arg4[%c0_9, %c0_10] : memref<128x128xbf16, #tpu.memory_space<vmem>>, vector<128x128xbf16>
    %cst_11 = arith.constant dense<0.000000e+00> : vector<16x128xf32>
    %22 = tpu.matmul %20, %21, %cst_11 {dimension_numbers = #tpu.dot_dimension_numbers<[1], [0], [0], [1], [0, 0, 1, 1], [], []>} : vector<16x128xbf16>, vector<128x128xbf16>, vector<16x128xf32> -> vector<16x128xf32>
    %c0_12 = arith.constant 0 : index
    %c0_13 = arith.constant 0 : index
    %23 = vector.load %arg5[%c0_12, %c0_13] : memref<1x128xf32, #tpu.memory_space<vmem>>, vector<1x128xf32>
    %24 = vector.broadcast %23 : vector<1x128xf32> to vector<16x128xf32>
    %25 = arith.addf %22, %24 : vector<16x128xf32>
    %26 = arith.addf %25, %0 : vector<16x128xf32>
    %c0_14 = arith.constant 0 : index
    %c0_15 = arith.constant 0 : index
    %27 = vector.load %arg6[%c0_14, %c0_15] : memref<16x128xf32, #tpu.memory_space<vmem>>, vector<16x128xf32>
    tpu.vector_store %arg6[%c0_14, %c0_15], %26 {strides = array<i32>} : memref<16x128xf32, #tpu.memory_space<vmem>>, vector<16x128xf32>,
    return
  }
  func.func @transform_0(%arg0: i32) -> (i32, i32) {
    %c0_i32 = arith.constant 0 : i32
    %c0_i32_0 = arith.constant 0 : i32
    return %arg0, %c0_i32 : i32, i32
  }
  func.func @transform_1(%arg0: i32) -> (i32, i32) {
    %c0_i32 = arith.constant 0 : i32
    %c0_i32_0 = arith.constant 0 : i32
    %c0_i32_1 = arith.constant 0 : i32
    return %c0_i32, %c0_i32_0 : i32, i32
  }
  func.func @transform_2(%arg0: i32) -> (i32, i32) {
    %c0_i32 = arith.constant 0 : i32
    %c0_i32_0 = arith.constant 0 : i32
    %c0_i32_1 = arith.constant 0 : i32
    return %c0_i32, %c0_i32_0 : i32, i32
  }
  func.func @transform_3(%arg0: i32) -> (i32, i32) {
    %c0_i32 = arith.constant 0 : i32
    %c0_i32_0 = arith.constant 0 : i32
    %c0_i32_1 = arith.constant 0 : i32
    return %c0_i32, %c0_i32_0 : i32, i32
  }
  func.func @transform_4(%arg0: i32) -> (i32, i32) {
    %c0_i32 = arith.constant 0 : i32
    %c0_i32_0 = arith.constant 0 : i32
    %c0_i32_1 = arith.constant 0 : i32
    return %c0_i32, %c0_i32_0 : i32, i32
  }
  func.func @transform_5(%arg0: i32) -> (i32, i32) {
    %c0_i32 = arith.constant 0 : i32
    %c0_i32_0 = arith.constant 0 : i32
    return %arg0, %c0_i32 : i32, i32
  }
}

</mosaic_0001>

<llo_original>
// kernel: tpu_custom_call.1
$region0: #{tpu_custom_call.1}
  #allocation0 [shape = 'u32[]', space=smem, size = 0x4, offset = 0x4, fixed_abs, tag = 'smem constant byte address 0x4 - core index']
  #allocation1 [shape = 'u32[144,128]{1,0:T(1,128)}', space=vmem, size = 0x12000, scoped, tag = 'internal scratch']
  %s0 = inlined_call_operand.hbm [shape: f32[16,128], index: 0, kind: input, shape index: {}]
  %s1 = inlined_call_operand.hbm [shape: bf16[128,128], index: 1, kind: input, shape index: {}]
  %s2 = inlined_call_operand.vmem [shape: f32[1,128], index: 2, kind: input, shape index: {}]
  %s3 = inlined_call_operand.hbm [shape: bf16[128,128], index: 3, kind: input, shape index: {}]
  %s4 = inlined_call_operand.vmem [shape: f32[1,128], index: 4, kind: input, shape index: {}]
  %s5 = inlined_call_operand.hbm [shape: f32[16,128], index: 5, kind: output, shape index: {}]
  %s6 = sld [smem:[#allocation0]]
  $region42: #{tpu_custom_call.1} parent=0
    _
  %s8 = ssub.s32 1, %s6
  %s9 = scalar_select 0, %s8, %s6
  $region1: #{tpu_custom_call.1} parent=0
    #allocation2 [shape = 'u8[8192]{0}', space=vmem, size = 0x2000, scoped, tag = 'input window, operand 0, single buffered']
    #allocation3 [shape = 's32[1]{0}', space=sflag, size = 0x4, scoped, tag = 'scoped memory for tpu_custom_call.1']
    #allocation4 [shape = 's32[1]{0}', space=sflag, size = 0x4, scoped, tag = 'scoped memory for tpu_custom_call.1']
    #allocation5 [shape = 'u8[32768]{0}', space=vmem, size = 0x8000, scoped, tag = 'input window, operand 1, single buffered']
    #allocation6 [shape = 's32[1]{0}', space=sflag, size = 0x4, scoped, tag = 'scoped memory for tpu_custom_call.1']
    #allocation7 [shape = 'u8[32768]{0}', space=vmem, size = 0x8000, scoped, tag = 'input window, operand 3, single buffered']
    #allocation8 [shape = 'u8[8192]{0}', space=vmem, size = 0x2000, scoped, tag = 'output window, operand 0, single buffered']
    %10 = vsyncpa [#allocation3], 0
    %11 = vsyncpa [#allocation6], 0
    %12 = vsyncpa [#allocation4], 0
    // Predicated region
    $region2: #{tpu_custom_call.1} parent=1 // pred_check
      _
    $region3: #{tpu_custom_call.1} parent=1 // pred_check_branch
      %14 = sbr.rel (0) target = $region5
    $region4: #{tpu_custom_call.1} parent=1 // pred_region
      %s16 = ssub.s32 256, 256
      %17 = vsyncadd [#allocation3], %s16
      %s18 = sshll.u32 [#allocation2], 4
      %s19 = int_to_ptr.vmem [resolvable:$true] %s18
      %24 = dma.hbm_to_vmem [thread:$0]  %s0, 256, %s19, [#allocation3], 128, 128, 8
    $region5: #{tpu_custom_call.1} parent=1 // pred_fallthru
      _
    // Predicated region
    $region6: #{tpu_custom_call.1} parent=1 // pred_check
      _
    $region7: #{tpu_custom_call.1} parent=1 // pred_check_branch
      %26 = sbr.rel (0) target = $region9
    $region8: #{tpu_custom_call.1} parent=1 // pred_region
      %s28 = ssub.s32 1024, 1024
      %29 = vsyncadd [#allocation6], %s28
      %s30 = sshll.u32 [#allocation5], 4
      %s31 = int_to_ptr.vmem [resolvable:$true] %s30
      %36 = dma.hbm_to_vmem [thread:$0]  %s1, 1024, %s31, [#allocation6], 64, 64, 4
    $region9: #{tpu_custom_call.1} parent=1 // pred_fallthru
      _
    // Predicated region
    $region10: #{tpu_custom_call.1} parent=1 // pred_check
      _
    $region11: #{tpu_custom_call.1} parent=1 // pred_check_branch
      %38 = sbr.rel (0) target = $region13
    $region12: #{tpu_custom_call.1} parent=1 // pred_region
      _
    $region13: #{tpu_custom_call.1} parent=1 // pred_fallthru
      _
    // Predicated region
    $region14: #{tpu_custom_call.1} parent=1 // pred_check
      _
    $region15: #{tpu_custom_call.1} parent=1 // pred_check_branch
      %40 = sbr.rel (0) target = $region17
    $region16: #{tpu_custom_call.1} parent=1 // pred_region
      %s42 = ssub.s32 1024, 1024
      %43 = vsyncadd [#allocation6], %s42
      %s44 = sshll.u32 [#allocation7], 4
      %s45 = int_to_ptr.vmem [resolvable:$true] %s44
      %50 = dma.hbm_to_vmem [thread:$0]  %s3, 1024, %s45, [#allocation6], 64, 64, 4
    $region17: #{tpu_custom_call.1} parent=1 // pred_fallthru
      _
    // Predicated region
    $region18: #{tpu_custom_call.1} parent=1 // pred_check
      _
    $region19: #{tpu_custom_call.1} parent=1 // pred_check_branch
      %52 = sbr.rel (0) target = $region21
    $region20: #{tpu_custom_call.1} parent=1 // pred_region
      _
    $region21: #{tpu_custom_call.1} parent=1 // pred_fallthru
      _
    // Predicated region
    $region22: #{tpu_custom_call.1} parent=1 // pred_check
      _
    $region23: #{tpu_custom_call.1} parent=1 // pred_check_branch
      %54 = sbr.rel (0) target = $region25
    $region24: #{tpu_custom_call.1} parent=1 // pred_region
      %55 = dma.done [#allocation3], 256
    $region25: #{tpu_custom_call.1} parent=1 // pred_fallthru
      _
    // Predicated region
    $region26: #{tpu_custom_call.1} parent=1 // pred_check
      _
    $region27: #{tpu_custom_call.1} parent=1 // pred_check_branch
      %57 = sbr.rel (0) target = $region29
    $region28: #{tpu_custom_call.1} parent=1 // pred_region
      %58 = dma.done [#allocation6], 1024
    $region29: #{tpu_custom_call.1} parent=1 // pred_fallthru
      _
    // Predicated region
    $region30: #{tpu_custom_call.1} parent=1 // pred_check
      _
    $region31: #{tpu_custom_call.1} parent=1 // pred_check_branch
      %60 = sbr.rel (0) target = $region33
    $region32: #{tpu_custom_call.1} parent=1 // pred_region
      %61 = dma.done [#allocation6], 1024
    $region33: #{tpu_custom_call.1} parent=1 // pred_fallthru
      _
    %v63 = vld [vmem:[#allocation2] sm:$0xff]
    %v64 = vld [vmem:[#allocation2 + $0x8] sm:$0xff]
    %v65 = vpack.c.bf16 %v64, %v63
    %v66 = vld [vmem:[#allocation5] sm:$0xf]
    %v67 = vld [vmem:[#allocation5 + $0x4] sm:$0xf]
    %v68 = vld [vmem:[#allocation5 + $0x8] sm:$0xf]
    %v69 = vld [vmem:[#allocation5 + $0xc] sm:$0xf]
    %v70 = vld [vmem:[#allocation5 + $0x10] sm:$0xf]
    %v71 = vld [vmem:[#allocation5 + $0x14] sm:$0xf]
    %v72 = vld [vmem:[#allocation5 + $0x18] sm:$0xf]
    %v73 = vld [vmem:[#allocation5 + $0x1c] sm:$0xf]
    %v74 = vld [vmem:[#allocation5 + $0x20] sm:$0xf]
    %v75 = vld [vmem:[#allocation5 + $0x24] sm:$0xf]
    %v76 = vld [vmem:[#allocation5 + $0x28] sm:$0xf]
    %v77 = vld [vmem:[#allocation5 + $0x2c] sm:$0xf]
    %v78 = vld [vmem:[#allocation5 + $0x30] sm:$0xf]
    %v79 = vld [vmem:[#allocation5 + $0x34] sm:$0xf]
    %v80 = vld [vmem:[#allocation5 + $0x38] sm:$0xf]
    %v81 = vld [vmem:[#allocation5 + $0x3c] sm:$0xf]
    %v82 = vld [vmem:[%s2] sm:$0x1]
    %v84 = vlaneseq
    %v85 = vshrl.u32 %v84, 7
    %v86 = vsub.s32 0, %v85
    %v87 = vrot.slane %v82, %v86
    %v105 = vunpack.c.l.b16 %v66
    %v106 = vunpack.c.l.b16 %v67
    %v107 = vunpack.c.l.b16 %v68
    %v108 = vunpack.c.l.b16 %v69
    %v109 = vunpack.c.l.b16 %v70
    %v110 = vunpack.c.l.b16 %v71
    %v111 = vunpack.c.l.b16 %v72
    %v112 = vunpack.c.l.b16 %v73
    %v113 = vunpack.c.l.b16 %v74
    %v114 = vunpack.c.l.b16 %v75
    %v115 = vunpack.c.l.b16 %v76
    %v116 = vunpack.c.l.b16 %v77
    %v117 = vunpack.c.l.b16 %v78
    %v118 = vunpack.c.l.b16 %v79
    %v119 = vunpack.c.l.b16 %v80
    %v120 = vunpack.c.l.b16 %v81
    %v121 = vpack.c.b16 %v106, %v105
    %v122 = vpack.c.b16 %v108, %v107
    %v123 = vpack.c.b16 %v110, %v109
    %v124 = vpack.c.b16 %v112, %v111
    %v125 = vpack.c.b16 %v114, %v113
    %v126 = vpack.c.b16 %v116, %v115
    %v127 = vpack.c.b16 %v118, %v117
    %v128 = vpack.c.b16 %v120, %v119
    %137 = vmatprep.subr.bf16.mxu0 0
    %138 = vmatpush1.bf16.msra.mxu0 %v121
    %139 = vmatprep.subr.bf16.mxu0 0
    %140 = vmatpush1.bf16.msra.mxu0 %v122
    %141 = vmatprep.subr.bf16.mxu0 0
    %142 = vmatpush1.bf16.msra.mxu0 %v123
    %143 = vmatprep.subr.bf16.mxu0 0
    %144 = vmatpush1.bf16.msra.mxu0 %v124
    %145 = vmatprep.subr.bf16.mxu0 0
    %146 = vmatpush1.bf16.msra.mxu0 %v125
    %147 = vmatprep.subr.bf16.mxu0 0
    %148 = vmatpush1.bf16.msra.mxu0 %v126
    %149 = vmatprep.subr.bf16.mxu0 0
    %150 = vmatpush1.bf16.msra.mxu0 %v127
    %151 = vmatprep.subr.bf16.mxu0 0
    %152 = vmatpush1.bf16.msra.mxu0 %v128
    %153 = vmatprep.subr.bf16.mxu0 0
    %154 = vmatpush1.bf16.msra.mxu0 0
    %155 = vmatprep.subr.bf16.mxu0 0
    %156 = vmatpush1.bf16.msra.mxu0 0
    %157 = vmatprep.subr.bf16.mxu0 0
    %158 = vmatpush1.bf16.msra.mxu0 0
    %159 = vmatprep.subr.bf16.mxu0 0
    %160 = vmatpush1.bf16.msra.mxu0 0
    %161 = vmatprep.subr.bf16.mxu0 0
    %162 = vmatpush1.bf16.msra.mxu0 0
    %163 = vmatprep.subr.bf16.mxu0 0
    %164 = vmatpush1.bf16.msra.mxu0 0
    %165 = vmatprep.subr.bf16.mxu0 0
    %166 = vmatpush1.bf16.msra.mxu0 0
    %167 = vmatprep.subr.bf16.mxu0 0
    %168 = vmatpush1.bf16.msra.mxu0 0
    %169 = vmatprep.mubr.bf16.mxu0 0
    %170 = vmatmul.mubr.bf16.gmra.mrb[0].mxu0 %v65
    %v171 = vpop.f32.mrb[0].mxu0
    %v172 = vadd.f32 %v87, %v171
    %v173 = vpop.f32.mrb[0].mxu0
    %v174 = vpop.f32.mrb[0].mxu0
    %v175 = vadd.f32 %v87, %v174
    %v176 = vpop.f32.mrb[0].mxu0
    %177 = vdwg.mxu0
    %v178 = vmul.f32 %v172, %v172
    %v179 = vmul.f32 %v175, %v175
    %v180 = vmul.f32 %v172, %v178
    %v181 = vmul.f32 %v175, %v179
    %v182 = vmul.f32 %v180, 0.044715
    %v183 = vmul.f32 %v181, 0.044715
    %v184 = vadd.f32 %v172, %v182
    %v185 = vadd.f32 %v175, %v183
    %v186 = vmul.f32 %v184, 0.7978846
    %v187 = vmul.f32 %v185, 0.7978846
    %v188 = vtanh.pop %v186
    %v189 = vtanh.pop %v187
    %v190 = vadd.f32 %v188, 1.0
    %v191 = vadd.f32 %v189, 1.0
    %v192 = vmul.f32 %v190, 0.5
    %v193 = vmul.f32 %v191, 0.5
    %v194 = vmul.f32 %v172, %v192
    %v195 = vmul.f32 %v175, %v193
    %v196 = vpack.c.bf16 %v195, %v194
    %v197 = vld [vmem:[#allocation7] sm:$0xf]
    %v198 = vld [vmem:[#allocation7 + $0x4] sm:$0xf]
    %v199 = vld [vmem:[#allocation7 + $0x8] sm:$0xf]
    %v200 = vld [vmem:[#allocation7 + $0xc] sm:$0xf]
    %v201 = vld [vmem:[#allocation7 + $0x10] sm:$0xf]
    %v202 = vld [vmem:[#allocation7 + $0x14] sm:$0xf]
    %v203 = vld [vmem:[#allocation7 + $0x18] sm:$0xf]
    %v204 = vld [vmem:[#allocation7 + $0x1c] sm:$0xf]
    %v205 = vld [vmem:[#allocation7 + $0x20] sm:$0xf]
    %v206 = vld [vmem:[#allocation7 + $0x24] sm:$0xf]
    %v207 = vld [vmem:[#allocation7 + $0x28] sm:$0xf]
    %v208 = vld [vmem:[#allocation7 + $0x2c] sm:$0xf]
    %v209 = vld [vmem:[#allocation7 + $0x30] sm:$0xf]
    %v210 = vld [vmem:[#allocation7 + $0x34] sm:$0xf]
    %v211 = vld [vmem:[#allocation7 + $0x38] sm:$0xf]
    %v212 = vld [vmem:[#allocation7 + $0x3c] sm:$0xf]
    %v213 = vld [vmem:[%s4] sm:$0x1]
    %v215 = vlaneseq
    %v216 = vshrl.u32 %v215, 7
    %v217 = vsub.s32 0, %v216
    %v218 = vrot.slane %v213, %v217
    %v236 = vunpack.c.l.b16 %v197
    %v237 = vunpack.c.l.b16 %v198
    %v238 = vunpack.c.l.b16 %v199
    %v239 = vunpack.c.l.b16 %v200
    %v240 = vunpack.c.l.b16 %v201
    %v241 = vunpack.c.l.b16 %v202
    %v242 = vunpack.c.l.b16 %v203
    %v243 = vunpack.c.l.b16 %v204
    %v244 = vunpack.c.l.b16 %v205
    %v245 = vunpack.c.l.b16 %v206
    %v246 = vunpack.c.l.b16 %v207
    %v247 = vunpack.c.l.b16 %v208
    %v248 = vunpack.c.l.b16 %v209
    %v249 = vunpack.c.l.b16 %v210
    %v250 = vunpack.c.l.b16 %v211
    %v251 = vunpack.c.l.b16 %v212
    %v252 = vpack.c.b16 %v237, %v236
    %v253 = vpack.c.b16 %v239, %v238
    %v254 = vpack.c.b16 %v241, %v240
    %v255 = vpack.c.b16 %v243, %v242
    %v256 = vpack.c.b16 %v245, %v244
    %v257 = vpack.c.b16 %v247, %v246
    %v258 = vpack.c.b16 %v249, %v248
    %v259 = vpack.c.b16 %v251, %v250
    %268 = vmatprep.subr.bf16.mxu0 0
    %269 = vmatpush1.bf16.msra.mxu0 %v252
    %270 = vmatprep.subr.bf16.mxu0 0
    %271 = vmatpush1.bf16.msra.mxu0 %v253
    %272 = vmatprep.subr.bf16.mxu0 0
    %273 = vmatpush1.bf16.msra.mxu0 %v254
    %274 = vmatprep.subr.bf16.mxu0 0
    %275 = vmatpush1.bf16.msra.mxu0 %v255
    %276 = vmatprep.subr.bf16.mxu0 0
    %277 = vmatpush1.bf16.msra.mxu0 %v256
    %278 = vmatprep.subr.bf16.mxu0 0
    %279 = vmatpush1.bf16.msra.mxu0 %v257
    %280 = vmatprep.subr.bf16.mxu0 0
    %281 = vmatpush1.bf16.msra.mxu0 %v258
    %282 = vmatprep.subr.bf16.mxu0 0
    %283 = vmatpush1.bf16.msra.mxu0 %v259
    %284 = vmatprep.subr.bf16.mxu0 0
    %285 = vmatpush1.bf16.msra.mxu0 0
    %286 = vmatprep.subr.bf16.mxu0 0
    %287 = vmatpush1.bf16.msra.mxu0 0
    %288 = vmatprep.subr.bf16.mxu0 0
    %289 = vmatpush1.bf16.msra.mxu0 0
    %290 = vmatprep.subr.bf16.mxu0 0
    %291 = vmatpush1.bf16.msra.mxu0 0
    %292 = vmatprep.subr.bf16.mxu0 0
    %293 = vmatpush1.bf16.msra.mxu0 0
    %294 = vmatprep.subr.bf16.mxu0 0
    %295 = vmatpush1.bf16.msra.mxu0 0
    %296 = vmatprep.subr.bf16.mxu0 0
    %297 = vmatpush1.bf16.msra.mxu0 0
    %298 = vmatprep.subr.bf16.mxu0 0
    %299 = vmatpush1.bf16.msra.mxu0 0
    %300 = vmatprep.mubr.bf16.mxu0 0
    %301 = vmatmul.mubr.bf16.gmra.mrb[0].mxu0 %v196
    %v302 = vpop.f32.mrb[0].mxu0
    %v303 = vadd.f32 %v218, %v302
    %v304 = vpop.f32.mrb[0].mxu0
    %v305 = vpop.f32.mrb[0].mxu0
    %v306 = vadd.f32 %v218, %v305
    %v307 = vpop.f32.mrb[0].mxu0
    %308 = vdwg.mxu0
    %v309 = vadd.f32 %v303, %v63
    %v310 = vadd.f32 %v306, %v64
    %311 = vst [vmem:[#allocation8] sm:$0xff] %v309
    %312 = vst [vmem:[#allocation8 + $0x8] sm:$0xff] %v310
    // Predicated region
    $region34: #{tpu_custom_call.1} parent=1 // pred_check
      _
    $region35: #{tpu_custom_call.1} parent=1 // pred_check_branch
      %314 = sbr.rel (0) target = $region37
    $region36: #{tpu_custom_call.1} parent=1 // pred_region
      %s316 = ssub.s32 256, 256
      %317 = vsyncadd [#allocation4], %s316
      %s318 = sshll.u32 [#allocation8], 4
      %s319 = int_to_ptr.vmem [resolvable:$true] %s318
      %324 = dma.vmem_to_hbm [thread:$0]  %s319, 256, %s5, [#allocation4], 128, 128, 8
    $region37: #{tpu_custom_call.1} parent=1 // pred_fallthru
      _
    // Predicated region
    $region38: #{tpu_custom_call.1} parent=1 // pred_check
      _
    $region39: #{tpu_custom_call.1} parent=1 // pred_check_branch
      %326 = sbr.rel (0) target = $region41
    $region40: #{tpu_custom_call.1} parent=1 // pred_region
      %327 = dma.done [#allocation4], 256
    $region41: #{tpu_custom_call.1} parent=1 // pred_fallthru
      _
    %328 = vsyncpa [#allocation3], 1
    %329 = vsyncpa [#allocation6], 1
    %330 = vsyncpa [#allocation4], 1

</llo_original>
